<compile_context>
chip_gen: v7x
topology: tpu7x:2x2x1
jax: 0.10.0
libtpu: 0.0.40
codegen_flags: <defaults>
</compile_context>

<pallas_src>
import functools

import jax
import jax.numpy as jnp
from jax.experimental import pallas as pl
from jax.experimental.pallas import tpu as pltpu

STATE_DIM = 128      # ALE/Assault-ram-v5 observation_space.shape[0]
HIDDEN_DIM = 256
ACTION_DIM = 7       # ALE/Assault action_space.n
PAD_OUT = 128        # lane-padded final output width


def _round_up(x, m):
    return ((x + m - 1) // m) * m


def _default_tile_m():
    """MXU-matched batch tile: 128 on v5e (4x128x128 MXU), 256 on v6e/v7x."""
    try:
        kind = jax.devices()[0].device_kind.lower()
    except Exception:
        kind = ""
    return 128 if "v5" in kind else 256


def qnet_kernel(x_ref, w1_ref, b1_ref, w2_ref, b2_ref, w3_ref, b3_ref, o_ref):
    # fc1 + relu : bf16 MXU operands, f32 accumulation, f32 VPU elementwise.
    x = x_ref[...].astype(jnp.bfloat16)          # cast in-kernel (VPU), no extra HBM pass
    h1 = jnp.dot(x, w1_ref[...], preferred_element_type=jnp.float32)
    h1 = jnp.maximum(h1 + b1_ref[...], 0.0)
    # fc2 + relu
    h2 = jnp.dot(h1.astype(jnp.bfloat16), w2_ref[...],
                 preferred_element_type=jnp.float32)
    h2 = jnp.maximum(h2 + b2_ref[...], 0.0)
    # fc3 (no activation); output padded to 128 lanes -> unmasked, lane-dense store
    q = jnp.dot(h2.astype(jnp.bfloat16), w3_ref[...],
                preferred_element_type=jnp.float32)
    o_ref[...] = q + b3_ref[...]


@functools.partial(jax.jit, static_argnames=("tile_m",))
def _qnet_pallas(x_pad, w1_t, b1, w2_t, b2, w3_t_pad, b3_pad, *, tile_m):
    b_pad = x_pad.shape[0]
    grid = (b_pad // tile_m,)

    flops = 2 * b_pad * (STATE_DIM * HIDDEN_DIM
                         + HIDDEN_DIM * HIDDEN_DIM
                         + HIDDEN_DIM * PAD_OUT)
    bytes_accessed = (
        x_pad.size * x_pad.dtype.itemsize
        + w1_t.size * w1_t.dtype.itemsize
        + w2_t.size * w2_t.dtype.itemsize
        + w3_t_pad.size * w3_t_pad.dtype.itemsize
        + (b1.size + b2.size + b3_pad.size) * 4
        + b_pad * PAD_OUT * 4)

    return pl.pallas_call(
        qnet_kernel,
        out_shape=jax.ShapeDtypeStruct((b_pad, PAD_OUT), jnp.float32),
        grid=grid,
        in_specs=[
            pl.BlockSpec((tile_m, STATE_DIM), lambda i: (i, 0)),       # x tile (f32)
            pl.BlockSpec((STATE_DIM, HIDDEN_DIM), lambda i: (0, 0)),   # W1^T (VMEM-resident)
            pl.BlockSpec((1, HIDDEN_DIM), lambda i: (0, 0)),           # b1
            pl.BlockSpec((HIDDEN_DIM, HIDDEN_DIM), lambda i: (0, 0)),  # W2^T
            pl.BlockSpec((1, HIDDEN_DIM), lambda i: (0, 0)),           # b2
            pl.BlockSpec((HIDDEN_DIM, PAD_OUT), lambda i: (0, 0)),     # W3^T (lane-padded)
            pl.BlockSpec((1, PAD_OUT), lambda i: (0, 0)),              # b3 (lane-padded)
        ],
        out_specs=pl.BlockSpec((tile_m, PAD_OUT), lambda i: (i, 0)),
        compiler_params=pltpu.CompilerParams(
            dimension_semantics=("parallel",)),
        cost_estimate=pl.CostEstimate(
            flops=flops, transcendentals=0, bytes_accessed=bytes_accessed),
    )(x_pad, w1_t, b1, w2_t, b2, w3_t_pad, b3_pad)


def qnetwork_forward(x, params, tile_m=None):
    """x: (B, STATE_DIM) float32.  Returns (B, ACTION_DIM) float32 Q-values."""
    B = x.shape[0]
    if tile_m is None:
        tile_m = _default_tile_m()
    # Small batch: one sublane-aligned tile (grid of 1, no pipeline overhead).
    # Large batch: TILE_M tiles pipelined over a "parallel" batch grid axis
    # with VMEM-resident weights.
    tile_m = tile_m if B >= tile_m else _round_up(max(B, 1), 8)
    b_pad = _round_up(B, tile_m)

    x_f32 = x.astype(jnp.float32)
    if b_pad != B:
        x_f32 = jnp.pad(x_f32, ((0, b_pad - B), (0, 0)))

    out_pad = _qnet_pallas(
        x_f32, params["w1_t"], params["b1"], params["w2_t"], params["b2"],
        params["w3_t_pad"], params["b3_pad"], tile_m=tile_m)
    return out_pad[:B, :ACTION_DIM]


def init_params(key):
    """Mirrors nn.init.uniform_(-0.01, 0.01) on all Linear weights/biases.
    PyTorch weight shape is (out, in); we store the transpose (in, out), cast
    to bf16 for the MXU, and lane-pad the final layer to 128 outputs."""
    ks = jax.random.split(key, 6)
    u = lambda k, shape: jax.random.uniform(k, shape, jnp.float32, -0.01, 0.01)

    w1 = u(ks[0], (HIDDEN_DIM, STATE_DIM))     # fc1.weight
    b1 = u(ks[1], (HIDDEN_DIM,))               # fc1.bias
    w2 = u(ks[2], (HIDDEN_DIM, HIDDEN_DIM))    # fc2.weight
    b2 = u(ks[3], (HIDDEN_DIM,))               # fc2.bias
    w3 = u(ks[4], (ACTION_DIM, HIDDEN_DIM))    # fc3.weight
    b3 = u(ks[5], (ACTION_DIM,))               # fc3.bias

    w3_t_pad = jnp.zeros((HIDDEN_DIM, PAD_OUT), jnp.float32).at[:, :ACTION_DIM].set(w3.T)
    b3_pad = jnp.zeros((1, PAD_OUT), jnp.float32).at[0, :ACTION_DIM].set(b3)

    return {
        # bf16 MXU operands (halved weight DMA), f32 biases for VPU math
        "w1_t": w1.T.astype(jnp.bfloat16),
        "w2_t": w2.T.astype(jnp.bfloat16),
        "w3_t_pad": w3_t_pad.astype(jnp.bfloat16),
        "b1": b1.reshape(1, HIDDEN_DIM),
        "b2": b2.reshape(1, HIDDEN_DIM),
        "b3_pad": b3_pad,
        # f32 originals kept for the pure-JAX reference checks
        "_w1": w1, "_b1": b1, "_w2": w2, "_b2": b2, "_w3": w3, "_b3": b3,
    }


def reference_forward_f32(x, p):
    """Exact PyTorch-semantics reference in f32."""
    h1 = jax.nn.relu(x @ p["_w1"].T + p["_b1"])
    h2 = jax.nn.relu(h1 @ p["_w2"].T + p["_b2"])
    return h2 @ p["_w3"].T + p["_b3"]


def reference_forward_bf16(x, p):
    """Reference mirroring the kernel's bf16-operand / f32-accumulate math."""
    h1 = jnp.maximum(
        jnp.dot(x.astype(jnp.bfloat16), p["w1_t"],
                preferred_element_type=jnp.float32) + p["b1"], 0.0)
    h2 = jnp.maximum(
        jnp.dot(h1.astype(jnp.bfloat16), p["w2_t"],
                preferred_element_type=jnp.float32) + p["b2"], 0.0)
    q = jnp.dot(h2.astype(jnp.bfloat16), p["w3_t_pad"],
                preferred_element_type=jnp.float32) + p["b3_pad"]
    return q[:, :ACTION_DIM]


if __name__ == "__main__":
    key = jax.random.PRNGKey(0)
    k_x, k_x2, k_p = jax.random.split(key, 3)
    params = init_params(k_p)

    # Small batch (action-selection style): single aligned tile, grid of 1.
    B = 8
    x = jax.random.uniform(k_x, (B, STATE_DIM), jnp.float32, 0.0, 1.0)
    q = jax.block_until_ready(qnetwork_forward(x, params))
    assert q.shape == (B, ACTION_DIM), q.shape
    q_ref_bf16 = reference_forward_bf16(x, params)
    q_ref_f32 = reference_forward_f32(x, params)
    assert jnp.allclose(q, q_ref_bf16, atol=1e-4, rtol=1e-3), \
        float(jnp.max(jnp.abs(q - q_ref_bf16)))
    assert jnp.allclose(q, q_ref_f32, atol=5e-3, rtol=5e-2), \
        float(jnp.max(jnp.abs(q - q_ref_f32)))

    # Ragged larger batch: exercises the multi-tile, zero-padded grid path.
    B2 = 300
    x2 = jax.random.uniform(k_x2, (B2, STATE_DIM), jnp.float32, 0.0, 1.0)
    q2 = jax.block_until_ready(qnetwork_forward(x2, params))
    assert q2.shape == (B2, ACTION_DIM), q2.shape
    q2_ref_bf16 = reference_forward_bf16(x2, params)
    q2_ref_f32 = reference_forward_f32(x2, params)
    assert jnp.allclose(q2, q2_ref_bf16, atol=1e-4, rtol=1e-3), \
        float(jnp.max(jnp.abs(q2 - q2_ref_bf16)))
    assert jnp.allclose(q2, q2_ref_f32, atol=5e-3, rtol=5e-2), \
        float(jnp.max(jnp.abs(q2 - q2_ref_f32)))

    print("KERNEL_OK")
</pallas_src>

<mosaic_0001>
module attributes {stable_mosaic.version = 11 : i64} {
  func.func @qnet_kernel(%arg0: i32, %arg1: memref<8x128xf32, #tpu.memory_space<vmem>>, %arg2: memref<128x256xbf16, #tpu.memory_space<vmem>>, %arg3: memref<1x256xf32, #tpu.memory_space<vmem>>, %arg4: memref<256x256xbf16, #tpu.memory_space<vmem>>, %arg5: memref<1x256xf32, #tpu.memory_space<vmem>>, %arg6: memref<256x128xbf16, #tpu.memory_space<vmem>>, %arg7: memref<1x128xf32, #tpu.memory_space<vmem>>, %arg8: memref<8x128xf32, #tpu.memory_space<vmem>>) attributes {dimension_semantics = [#tpu.dimension_semantics<parallel>], iteration_bounds = array<i64: 1>, scalar_prefetch = 0 : i64, scratch_operands = 0 : i64, tpu.core_type = #tpu.core_type<tc>, window_params = [{transform_indices = @transform_0, window_bounds = array<i64: 8, 128>}, {pipeline_mode = #tpu.pipeline_mode<synchronous>, transform_indices = @transform_1, window_bounds = array<i64: 128, 256>}, {pipeline_mode = #tpu.pipeline_mode<synchronous>, transform_indices = @transform_2, window_bounds = array<i64: 1, 256>}, {pipeline_mode = #tpu.pipeline_mode<synchronous>, transform_indices = @transform_3, window_bounds = array<i64: 256, 256>}, {pipeline_mode = #tpu.pipeline_mode<synchronous>, transform_indices = @transform_4, window_bounds = array<i64: 1, 256>}, {pipeline_mode = #tpu.pipeline_mode<synchronous>, transform_indices = @transform_5, window_bounds = array<i64: 256, 128>}, {pipeline_mode = #tpu.pipeline_mode<synchronous>, transform_indices = @transform_6, window_bounds = array<i64: 1, 128>}, {transform_indices = @transform_7, window_bounds = array<i64: 8, 128>}]} {
    %c0 = arith.constant 0 : index
    %c0_0 = arith.constant 0 : index
    %0 = vector.load %arg1[%c0, %c0_0] : memref<8x128xf32, #tpu.memory_space<vmem>>, vector<8x128xf32>
    %1 = arith.truncf %0 : vector<8x128xf32> to vector<8x128xbf16>
    %c0_1 = arith.constant 0 : index
    %c0_2 = arith.constant 0 : index
    %2 = vector.load %arg2[%c0_1, %c0_2] : memref<128x256xbf16, #tpu.memory_space<vmem>>, vector<128x256xbf16>
    %cst = arith.constant dense<0.000000e+00> : vector<8x256xf32>
    %3 = tpu.matmul %1, %2, %cst {dimension_numbers = #tpu.dot_dimension_numbers<[1], [0], [0], [1], [0, 0, 1, 1], [], []>} : vector<8x128xbf16>, vector<128x256xbf16>, vector<8x256xf32> -> vector<8x256xf32>
    %c0_3 = arith.constant 0 : index
    %c0_4 = arith.constant 0 : index
    %4 = vector.load %arg3[%c0_3, %c0_4] : memref<1x256xf32, #tpu.memory_space<vmem>>, vector<1x256xf32>
    %5 = vector.broadcast %4 : vector<1x256xf32> to vector<8x256xf32>
    %6 = arith.addf %3, %5 : vector<8x256xf32>
    %cst_5 = arith.constant 0.000000e+00 : f32
    %7 = vector.broadcast %cst_5 : f32 to vector<8x256xf32>
    %8 = arith.maximumf %6, %7 : vector<8x256xf32>
    %9 = arith.truncf %8 : vector<8x256xf32> to vector<8x256xbf16>
    %c0_6 = arith.constant 0 : index
    %c0_7 = arith.constant 0 : index
    %10 = vector.load %arg4[%c0_6, %c0_7] : memref<256x256xbf16, #tpu.memory_space<vmem>>, vector<256x256xbf16>
    %cst_8 = arith.constant dense<0.000000e+00> : vector<8x256xf32>
    %11 = tpu.matmul %9, %10, %cst_8 {dimension_numbers = #tpu.dot_dimension_numbers<[1], [0], [0], [1], [0, 0, 1, 1], [], []>} : vector<8x256xbf16>, vector<256x256xbf16>, vector<8x256xf32> -> vector<8x256xf32>
    %c0_9 = arith.constant 0 : index
    %c0_10 = arith.constant 0 : index
    %12 = vector.load %arg5[%c0_9, %c0_10] : memref<1x256xf32, #tpu.memory_space<vmem>>, vector<1x256xf32>
    %13 = vector.broadcast %12 : vector<1x256xf32> to vector<8x256xf32>
    %14 = arith.addf %11, %13 : vector<8x256xf32>
    %cst_11 = arith.constant 0.000000e+00 : f32
    %15 = vector.broadcast %cst_11 : f32 to vector<8x256xf32>
    %16 = arith.maximumf %14, %15 : vector<8x256xf32>
    %17 = arith.truncf %16 : vector<8x256xf32> to vector<8x256xbf16>
    %c0_12 = arith.constant 0 : index
    %c0_13 = arith.constant 0 : index
    %18 = vector.load %arg6[%c0_12, %c0_13] : memref<256x128xbf16, #tpu.memory_space<vmem>>, vector<256x128xbf16>
    %cst_14 = arith.constant dense<0.000000e+00> : vector<8x128xf32>
    %19 = tpu.matmul %17, %18, %cst_14 {dimension_numbers = #tpu.dot_dimension_numbers<[1], [0], [0], [1], [0, 0, 1, 1], [], []>} : vector<8x256xbf16>, vector<256x128xbf16>, vector<8x128xf32> -> vector<8x128xf32>
    %c0_15 = arith.constant 0 : index
    %c0_16 = arith.constant 0 : index
    %20 = vector.load %arg7[%c0_15, %c0_16] : memref<1x128xf32, #tpu.memory_space<vmem>>, vector<1x128xf32>
    %21 = vector.broadcast %20 : vector<1x128xf32> to vector<8x128xf32>
    %22 = arith.addf %19, %21 : vector<8x128xf32>
    %c0_17 = arith.constant 0 : index
    %c0_18 = arith.constant 0 : index
    %23 = vector.load %arg8[%c0_17, %c0_18] : memref<8x128xf32, #tpu.memory_space<vmem>>, vector<8x128xf32>
    tpu.vector_store %arg8[%c0_17, %c0_18], %22 {strides = array<i32>} : memref<8x128xf32, #tpu.memory_space<vmem>>, vector<8x128xf32>,
    return
  }
  func.func @transform_0(%arg0: i32) -> (i32, i32) {
    %c0_i32 = arith.constant 0 : i32
    %c0_i32_0 = arith.constant 0 : i32
    return %arg0, %c0_i32 : i32, i32
  }
  func.func @transform_1(%arg0: i32) -> (i32, i32) {
    %c0_i32 = arith.constant 0 : i32
    %c0_i32_0 = arith.constant 0 : i32
    %c0_i32_1 = arith.constant 0 : i32
    return %c0_i32, %c0_i32_0 : i32, i32
  }
  func.func @transform_2(%arg0: i32) -> (i32, i32) {
    %c0_i32 = arith.constant 0 : i32
    %c0_i32_0 = arith.constant 0 : i32
    %c0_i32_1 = arith.constant 0 : i32
    return %c0_i32, %c0_i32_0 : i32, i32
  }
  func.func @transform_3(%arg0: i32) -> (i32, i32) {
    %c0_i32 = arith.constant 0 : i32
    %c0_i32_0 = arith.constant 0 : i32
    %c0_i32_1 = arith.constant 0 : i32
    return %c0_i32, %c0_i32_0 : i32, i32
  }
  func.func @transform_4(%arg0: i32) -> (i32, i32) {
    %c0_i32 = arith.constant 0 : i32
    %c0_i32_0 = arith.constant 0 : i32
    %c0_i32_1 = arith.constant 0 : i32
    return %c0_i32, %c0_i32_0 : i32, i32
  }
  func.func @transform_5(%arg0: i32) -> (i32, i32) {
    %c0_i32 = arith.constant 0 : i32
    %c0_i32_0 = arith.constant 0 : i32
    %c0_i32_1 = arith.constant 0 : i32
    return %c0_i32, %c0_i32_0 : i32, i32
  }
  func.func @transform_6(%arg0: i32) -> (i32, i32) {
    %c0_i32 = arith.constant 0 : i32
    %c0_i32_0 = arith.constant 0 : i32
    %c0_i32_1 = arith.constant 0 : i32
    return %c0_i32, %c0_i32_0 : i32, i32
  }
  func.func @transform_7(%arg0: i32) -> (i32, i32) {
    %c0_i32 = arith.constant 0 : i32
    %c0_i32_0 = arith.constant 0 : i32
    return %arg0, %c0_i32 : i32, i32
  }
}

</mosaic_0001>

<llo_original>
// kernel: _qnet_pallas.1
$region0: #{_qnet_pallas.1}
  #allocation0 [shape = 'u32[]', space=smem, size = 0x4, offset = 0x4, fixed_abs, tag = 'smem constant byte address 0x4 - core index']
  #allocation1 [shape = 'u32[144,128]{1,0:T(1,128)}', space=vmem, size = 0x12000, scoped, tag = 'internal scratch']
  %s0 = inlined_call_operand.hbm [shape: f32[8,128], index: 0, kind: input, shape index: {}]
  %s1 = inlined_call_operand.hbm [shape: bf16[128,256], index: 1, kind: input, shape index: {}]
  %s2 = inlined_call_operand.vmem [shape: f32[1,256], index: 2, kind: input, shape index: {}]
  %s3 = inlined_call_operand.hbm [shape: bf16[256,256], index: 3, kind: input, shape index: {}]
  %s4 = inlined_call_operand.vmem [shape: f32[1,256], index: 4, kind: input, shape index: {}]
  %s5 = inlined_call_operand.hbm [shape: bf16[256,128], index: 5, kind: input, shape index: {}]
  %s6 = inlined_call_operand.vmem [shape: f32[1,128], index: 6, kind: input, shape index: {}]
  %s7 = inlined_call_operand.hbm [shape: f32[8,128], index: 7, kind: output, shape index: {}]
  %s8 = sld [smem:[#allocation0]]
  $region54: #{_qnet_pallas.1} parent=0
    _
  %s10 = ssub.s32 1, %s8
  %s11 = scalar_select 0, %s10, %s8
  $region1: #{_qnet_pallas.1} parent=0
    #allocation2 [shape = 'u8[4096]{0}', space=vmem, size = 0x1000, scoped, tag = 'input window, operand 0, single buffered']
    #allocation3 [shape = 's32[1]{0}', space=sflag, size = 0x4, scoped, tag = 'scoped memory for _qnet_pallas.1']
    #allocation4 [shape = 's32[1]{0}', space=sflag, size = 0x4, scoped, tag = 'scoped memory for _qnet_pallas.1']
    #allocation5 [shape = 'u8[65536]{0}', space=vmem, size = 0x10000, scoped, tag = 'input window, operand 1, single buffered']
    #allocation6 [shape = 's32[1]{0}', space=sflag, size = 0x4, scoped, tag = 'scoped memory for _qnet_pallas.1']
    #allocation7 [shape = 'u8[131072]{0}', space=vmem, size = 0x20000, scoped, tag = 'input window, operand 3, single buffered']
    #allocation8 [shape = 'u8[65536]{0}', space=vmem, size = 0x10000, scoped, tag = 'input window, operand 5, single buffered']
    #allocation9 [shape = 's32[1]{0}', space=sflag, size = 0x4, scoped, tag = 'scoped memory for _qnet_pallas.1']
    #allocation10 [shape = 'u8[4096]{0}', space=vmem, size = 0x1000, scoped, tag = 'output window, operand 0, single buffered']
    %12 = vsyncpa [#allocation3], 0
    %13 = vsyncpa [#allocation6], 0
    %14 = vsyncpa [#allocation9], 0
    %15 = vsyncpa [#allocation4], 0
    // Predicated region
    $region2: #{_qnet_pallas.1} parent=1 // pred_check
      _
    $region3: #{_qnet_pallas.1} parent=1 // pred_check_branch
      %17 = sbr.rel (0) target = $region5
    $region4: #{_qnet_pallas.1} parent=1 // pred_region
      %s19 = ssub.s32 128, 128
      %20 = vsyncadd [#allocation3], %s19
      %s22 = sshll.u32 [#allocation2], 4
      %s23 = int_to_ptr.vmem [resolvable:$true] %s22
      %25 = dma.hbm_to_vmem [thread:$0]  %s0, 128, %s23, [#allocation3]
    $region5: #{_qnet_pallas.1} parent=1 // pred_fallthru
      _
    // Predicated region
    $region6: #{_qnet_pallas.1} parent=1 // pred_check
      _
    $region7: #{_qnet_pallas.1} parent=1 // pred_check_branch
      %27 = sbr.rel (0) target = $region9
    $region8: #{_qnet_pallas.1} parent=1 // pred_region
      %s29 = ssub.s32 2048, 2048
      %30 = vsyncadd [#allocation6], %s29
      %s31 = sshll.u32 [#allocation5], 4
      %s32 = int_to_ptr.vmem [resolvable:$true] %s31
      %37 = dma.hbm_to_vmem [thread:$0]  %s1, 2048, %s32, [#allocation6], 128, 128, 8
    $region9: #{_qnet_pallas.1} parent=1 // pred_fallthru
      _
    // Predicated region
    $region10: #{_qnet_pallas.1} parent=1 // pred_check
      _
    $region11: #{_qnet_pallas.1} parent=1 // pred_check_branch
      %39 = sbr.rel (0) target = $region13
    $region12: #{_qnet_pallas.1} parent=1 // pred_region
      _
    $region13: #{_qnet_pallas.1} parent=1 // pred_fallthru
      _
    // Predicated region
    $region14: #{_qnet_pallas.1} parent=1 // pred_check
      _
    $region15: #{_qnet_pallas.1} parent=1 // pred_check_branch
      %41 = sbr.rel (0) target = $region17
    $region16: #{_qnet_pallas.1} parent=1 // pred_region
      %s43 = ssub.s32 4096, 4096
      %44 = vsyncadd [#allocation6], %s43
      %s45 = sshll.u32 [#allocation7], 4
      %s46 = int_to_ptr.vmem [resolvable:$true] %s45
      %51 = dma.hbm_to_vmem [thread:$0]  %s3, 4096, %s46, [#allocation6], 128, 128, 8
    $region17: #{_qnet_pallas.1} parent=1 // pred_fallthru
      _
    // Predicated region
    $region18: #{_qnet_pallas.1} parent=1 // pred_check
      _
    $region19: #{_qnet_pallas.1} parent=1 // pred_check_branch
      %53 = sbr.rel (0) target = $region21
    $region20: #{_qnet_pallas.1} parent=1 // pred_region
      _
    $region21: #{_qnet_pallas.1} parent=1 // pred_fallthru
      _
    // Predicated region
    $region22: #{_qnet_pallas.1} parent=1 // pred_check
      _
    $region23: #{_qnet_pallas.1} parent=1 // pred_check_branch
      %55 = sbr.rel (0) target = $region25
    $region24: #{_qnet_pallas.1} parent=1 // pred_region
      %s57 = ssub.s32 2048, 2048
      %58 = vsyncadd [#allocation9], %s57
      %s59 = sshll.u32 [#allocation8], 4
      %s60 = int_to_ptr.vmem [resolvable:$true] %s59
      %65 = dma.hbm_to_vmem [thread:$0]  %s5, 2048, %s60, [#allocation9], 64, 64, 4
    $region25: #{_qnet_pallas.1} parent=1 // pred_fallthru
      _
    // Predicated region
    $region26: #{_qnet_pallas.1} parent=1 // pred_check
      _
    $region27: #{_qnet_pallas.1} parent=1 // pred_check_branch
      %67 = sbr.rel (0) target = $region29
    $region28: #{_qnet_pallas.1} parent=1 // pred_region
      _
    $region29: #{_qnet_pallas.1} parent=1 // pred_fallthru
      _
    // Predicated region
    $region30: #{_qnet_pallas.1} parent=1 // pred_check
      _
    $region31: #{_qnet_pallas.1} parent=1 // pred_check_branch
      %69 = sbr.rel (0) target = $region33
    $region32: #{_qnet_pallas.1} parent=1 // pred_region
      %70 = dma.done [#allocation3], 128
    $region33: #{_qnet_pallas.1} parent=1 // pred_fallthru
      _
    // Predicated region
    $region34: #{_qnet_pallas.1} parent=1 // pred_check
      _
    $region35: #{_qnet_pallas.1} parent=1 // pred_check_branch
      %72 = sbr.rel (0) target = $region37
    $region36: #{_qnet_pallas.1} parent=1 // pred_region
      %73 = dma.done [#allocation6], 2048
    $region37: #{_qnet_pallas.1} parent=1 // pred_fallthru
      _
    // Predicated region
    $region38: #{_qnet_pallas.1} parent=1 // pred_check
      _
    $region39: #{_qnet_pallas.1} parent=1 // pred_check_branch
      %75 = sbr.rel (0) target = $region41
    $region40: #{_qnet_pallas.1} parent=1 // pred_region
      %76 = dma.done [#allocation6], 4096
    $region41: #{_qnet_pallas.1} parent=1 // pred_fallthru
      _
    // Predicated region
    $region42: #{_qnet_pallas.1} parent=1 // pred_check
      _
    $region43: #{_qnet_pallas.1} parent=1 // pred_check_branch
      %78 = sbr.rel (0) target = $region45
    $region44: #{_qnet_pallas.1} parent=1 // pred_region
      %79 = dma.done [#allocation9], 2048
    $region45: #{_qnet_pallas.1} parent=1 // pred_fallthru
      _
    %v81 = vld [vmem:[#allocation2] sm:$0xff]
    %v82 = vpack.c.bf16 %v81, %v81
    %v83 = vld [vmem:[#allocation5] sm:$0xff]
    %v84 = vld [vmem:[#allocation5 + $0x8] sm:$0xff]
    %v85 = vld [vmem:[#allocation5 + $0x10] sm:$0xff]
    %v86 = vld [vmem:[#allocation5 + $0x18] sm:$0xff]
    %v87 = vld [vmem:[#allocation5 + $0x20] sm:$0xff]
    %v88 = vld [vmem:[#allocation5 + $0x28] sm:$0xff]
    %v89 = vld [vmem:[#allocation5 + $0x30] sm:$0xff]
    %v90 = vld [vmem:[#allocation5 + $0x38] sm:$0xff]
    %v91 = vld [vmem:[#allocation5 + $0x40] sm:$0xff]
    %v92 = vld [vmem:[#allocation5 + $0x48] sm:$0xff]
    %v93 = vld [vmem:[#allocation5 + $0x50] sm:$0xff]
    %v94 = vld [vmem:[#allocation5 + $0x58] sm:$0xff]
    %v95 = vld [vmem:[#allocation5 + $0x60] sm:$0xff]
    %v96 = vld [vmem:[#allocation5 + $0x68] sm:$0xff]
    %v97 = vld [vmem:[#allocation5 + $0x70] sm:$0xff]
    %v98 = vld [vmem:[#allocation5 + $0x78] sm:$0xff]
    %v99 = vld [vmem:[%s2] sm:$0x3]
    %v101 = vlaneseq
    %v102 = vshrl.u32 %v101, 7
    %v103 = vsub.s32 0, %v102
    %v104 = vrot.slane %v99, %v103
    %v105 = vlaneseq
    %v106 = vshrl.u32 %v105, 7
    %v107 = vsub.s32 1, %v106
    %v108 = vrot.slane %v99, %v107
    %v127 = vunpack.c.l.b16 %v83
    %v128 = vunpack.c.h.b16 %v83
    %v129 = vunpack.c.l.b16 %v84
    %v130 = vunpack.c.h.b16 %v84
    %v131 = vunpack.c.l.b16 %v85
    %v132 = vunpack.c.h.b16 %v85
    %v133 = vunpack.c.l.b16 %v86
    %v134 = vunpack.c.h.b16 %v86
    %v135 = vunpack.c.l.b16 %v87
    %v136 = vunpack.c.h.b16 %v87
    %v137 = vunpack.c.l.b16 %v88
    %v138 = vunpack.c.h.b16 %v88
    %v139 = vunpack.c.l.b16 %v89
    %v140 = vunpack.c.h.b16 %v89
    %v141 = vunpack.c.l.b16 %v90
    %v142 = vunpack.c.h.b16 %v90
    %v143 = vunpack.c.l.b16 %v91
    %v144 = vunpack.c.h.b16 %v91
    %v145 = vunpack.c.l.b16 %v92
    %v146 = vunpack.c.h.b16 %v92
    %v147 = vunpack.c.l.b16 %v93
    %v148 = vunpack.c.h.b16 %v93
    %v149 = vunpack.c.l.b16 %v94
    %v150 = vunpack.c.h.b16 %v94
    %v151 = vunpack.c.l.b16 %v95
    %v152 = vunpack.c.h.b16 %v95
    %v153 = vunpack.c.l.b16 %v96
    %v154 = vunpack.c.h.b16 %v96
    %v155 = vunpack.c.l.b16 %v97
    %v156 = vunpack.c.h.b16 %v97
    %v157 = vunpack.c.l.b16 %v98
    %v158 = vunpack.c.h.b16 %v98
    %v159 = vpack.c.b16 %v129, %v127
    %v160 = vpack.c.b16 %v130, %v128
    %v161 = vpack.c.b16 %v133, %v131
    %v162 = vpack.c.b16 %v134, %v132
    %v163 = vpack.c.b16 %v137, %v135
    %v164 = vpack.c.b16 %v138, %v136
    %v165 = vpack.c.b16 %v141, %v139
    %v166 = vpack.c.b16 %v142, %v140
    %v167 = vpack.c.b16 %v145, %v143
    %v168 = vpack.c.b16 %v146, %v144
    %v169 = vpack.c.b16 %v149, %v147
    %v170 = vpack.c.b16 %v150, %v148
    %v171 = vpack.c.b16 %v153, %v151
    %v172 = vpack.c.b16 %v154, %v152
    %v173 = vpack.c.b16 %v157, %v155
    %v174 = vpack.c.b16 %v158, %v156
    %191 = vmatprep.subr.bf16.mxu0 %v160
    %192 = vmatpush1.bf16.msra.mxu0 %v159
    %193 = vmatprep.subr.bf16.mxu0 %v162
    %194 = vmatpush1.bf16.msra.mxu0 %v161
    %195 = vmatprep.subr.bf16.mxu0 %v164
    %196 = vmatpush1.bf16.msra.mxu0 %v163
    %197 = vmatprep.subr.bf16.mxu0 %v166
    %198 = vmatpush1.bf16.msra.mxu0 %v165
    %199 = vmatprep.subr.bf16.mxu0 %v168
    %200 = vmatpush1.bf16.msra.mxu0 %v167
    %201 = vmatprep.subr.bf16.mxu0 %v170
    %202 = vmatpush1.bf16.msra.mxu0 %v169
    %203 = vmatprep.subr.bf16.mxu0 %v172
    %204 = vmatpush1.bf16.msra.mxu0 %v171
    %205 = vmatprep.subr.bf16.mxu0 %v174
    %206 = vmatpush1.bf16.msra.mxu0 %v173
    %207 = vmatprep.subr.bf16.mxu0 0
    %208 = vmatpush1.bf16.msra.mxu0 0
    %209 = vmatprep.subr.bf16.mxu0 0
    %210 = vmatpush1.bf16.msra.mxu0 0
    %211 = vmatprep.subr.bf16.mxu0 0
    %212 = vmatpush1.bf16.msra.mxu0 0
    %213 = vmatprep.subr.bf16.mxu0 0
    %214 = vmatpush1.bf16.msra.mxu0 0
    %215 = vmatprep.subr.bf16.mxu0 0
    %216 = vmatpush1.bf16.msra.mxu0 0
    %217 = vmatprep.subr.bf16.mxu0 0
    %218 = vmatpush1.bf16.msra.mxu0 0
    %219 = vmatprep.subr.bf16.mxu0 0
    %220 = vmatpush1.bf16.msra.mxu0 0
    %221 = vmatprep.subr.bf16.mxu0 0
    %222 = vmatpush1.bf16.msra.mxu0 0
    %223 = vmatprep.mubr.bf16.mxu0 0
    %224 = vmatmul.mubr.bf16.gmra.mrb[0].mxu0 %v82
    %v225 = vpop.f32.mrb[0].mxu0
    %v226 = vadd.f32 %v104, %v225
    %v227 = vpop.f32.mrb[0].mxu0
    %v228 = vadd.f32 %v108, %v227
    %v229 = vpop.f32.mrb[0].mxu0
    %v230 = vpop.f32.mrb[0].mxu0
    %231 = vdwg.mxu0
    %v232 = vmax.f32 %v226, 0.0
    %v233 = vmax.f32 %v228, 0.0
    %v234 = vpack.c.bf16 %v232, %v232
    %v235 = vpack.c.bf16 %v233, %v233
    %v236 = vld [vmem:[#allocation7] sm:$0xff]
    %v237 = vld [vmem:[#allocation7 + $0x8] sm:$0xff]
    %v238 = vld [vmem:[#allocation7 + $0x10] sm:$0xff]
    %v239 = vld [vmem:[#allocation7 + $0x18] sm:$0xff]
    %v240 = vld [vmem:[#allocation7 + $0x20] sm:$0xff]
    %v241 = vld [vmem:[#allocation7 + $0x28] sm:$0xff]
    %v242 = vld [vmem:[#allocation7 + $0x30] sm:$0xff]
    %v243 = vld [vmem:[#allocation7 + $0x38] sm:$0xff]
    %v244 = vld [vmem:[#allocation7 + $0x40] sm:$0xff]
    %v245 = vld [vmem:[#allocation7 + $0x48] sm:$0xff]
    %v246 = vld [vmem:[#allocation7 + $0x50] sm:$0xff]
    %v247 = vld [vmem:[#allocation7 + $0x58] sm:$0xff]
    %v248 = vld [vmem:[#allocation7 + $0x60] sm:$0xff]
    %v249 = vld [vmem:[#allocation7 + $0x68] sm:$0xff]
    %v250 = vld [vmem:[#allocation7 + $0x70] sm:$0xff]
    %v251 = vld [vmem:[#allocation7 + $0x78] sm:$0xff]
    %v252 = vld [vmem:[#allocation7 + $0x80] sm:$0xff]
    %v253 = vld [vmem:[#allocation7 + $0x88] sm:$0xff]
    %v254 = vld [vmem:[#allocation7 + $0x90] sm:$0xff]
    %v255 = vld [vmem:[#allocation7 + $0x98] sm:$0xff]
    %v256 = vld [vmem:[#allocation7 + $0xa0] sm:$0xff]
    %v257 = vld [vmem:[#allocation7 + $0xa8] sm:$0xff]
    %v258 = vld [vmem:[#allocation7 + $0xb0] sm:$0xff]
    %v259 = vld [vmem:[#allocation7 + $0xb8] sm:$0xff]
    %v260 = vld [vmem:[#allocation7 + $0xc0] sm:$0xff]
    %v261 = vld [vmem:[#allocation7 + $0xc8] sm:$0xff]
    %v262 = vld [vmem:[#allocation7 + $0xd0] sm:$0xff]
    %v263 = vld [vmem:[#allocation7 + $0xd8] sm:$0xff]
    %v264 = vld [vmem:[#allocation7 + $0xe0] sm:$0xff]
    %v265 = vld [vmem:[#allocation7 + $0xe8] sm:$0xff]
    %v266 = vld [vmem:[#allocation7 + $0xf0] sm:$0xff]
    %v267 = vld [vmem:[#allocation7 + $0xf8] sm:$0xff]
    %v268 = vld [vmem:[%s4] sm:$0x3]
    %v270 = vlaneseq
    %v271 = vshrl.u32 %v270, 7
    %v272 = vsub.s32 0, %v271
    %v273 = vrot.slane %v268, %v272
    %v274 = vlaneseq
    %v275 = vshrl.u32 %v274, 7
    %v276 = vsub.s32 1, %v275
    %v277 = vrot.slane %v268, %v276
    %v312 = vunpack.c.l.b16 %v236
    %v313 = vunpack.c.h.b16 %v236
    %v314 = vunpack.c.l.b16 %v237
    %v315 = vunpack.c.h.b16 %v237
    %v316 = vunpack.c.l.b16 %v238
    %v317 = vunpack.c.h.b16 %v238
    %v318 = vunpack.c.l.b16 %v239
    %v319 = vunpack.c.h.b16 %v239
    %v320 = vunpack.c.l.b16 %v240
    %v321 = vunpack.c.h.b16 %v240
    %v322 = vunpack.c.l.b16 %v241
    %v323 = vunpack.c.h.b16 %v241
    %v324 = vunpack.c.l.b16 %v242
    %v325 = vunpack.c.h.b16 %v242
    %v326 = vunpack.c.l.b16 %v243
    %v327 = vunpack.c.h.b16 %v243
    %v328 = vunpack.c.l.b16 %v244
    %v329 = vunpack.c.h.b16 %v244
    %v330 = vunpack.c.l.b16 %v245
    %v331 = vunpack.c.h.b16 %v245
    %v332 = vunpack.c.l.b16 %v246
    %v333 = vunpack.c.h.b16 %v246
    %v334 = vunpack.c.l.b16 %v247
    %v335 = vunpack.c.h.b16 %v247
    %v336 = vunpack.c.l.b16 %v248
    %v337 = vunpack.c.h.b16 %v248
    %v338 = vunpack.c.l.b16 %v249
    %v339 = vunpack.c.h.b16 %v249
    %v340 = vunpack.c.l.b16 %v250
    %v341 = vunpack.c.h.b16 %v250
    %v342 = vunpack.c.l.b16 %v251
    %v343 = vunpack.c.h.b16 %v251
    %v344 = vunpack.c.l.b16 %v252
    %v345 = vunpack.c.h.b16 %v252
    %v346 = vunpack.c.l.b16 %v253
    %v347 = vunpack.c.h.b16 %v253
    %v348 = vunpack.c.l.b16 %v254
    %v349 = vunpack.c.h.b16 %v254
    %v350 = vunpack.c.l.b16 %v255
    %v351 = vunpack.c.h.b16 %v255
    %v352 = vunpack.c.l.b16 %v256
    %v353 = vunpack.c.h.b16 %v256
    %v354 = vunpack.c.l.b16 %v257
    %v355 = vunpack.c.h.b16 %v257
    %v356 = vunpack.c.l.b16 %v258
    %v357 = vunpack.c.h.b16 %v258
    %v358 = vunpack.c.l.b16 %v259
    %v359 = vunpack.c.h.b16 %v259
    %v360 = vunpack.c.l.b16 %v260
    %v361 = vunpack.c.h.b16 %v260
    %v362 = vunpack.c.l.b16 %v261
    %v363 = vunpack.c.h.b16 %v261
    %v364 = vunpack.c.l.b16 %v262
    %v365 = vunpack.c.h.b16 %v262
    %v366 = vunpack.c.l.b16 %v263
    %v367 = vunpack.c.h.b16 %v263
    %v368 = vunpack.c.l.b16 %v264
    %v369 = vunpack.c.h.b16 %v264
    %v370 = vunpack.c.l.b16 %v265
    %v371 = vunpack.c.h.b16 %v265
    %v372 = vunpack.c.l.b16 %v266
    %v373 = vunpack.c.h.b16 %v266
    %v374 = vunpack.c.l.b16 %v267
    %v375 = vunpack.c.h.b16 %v267
    %v376 = vpack.c.b16 %v314, %v312
    %v377 = vpack.c.b16 %v315, %v313
    %v378 = vpack.c.b16 %v318, %v316
    %v379 = vpack.c.b16 %v319, %v317
    %v380 = vpack.c.b16 %v322, %v320
    %v381 = vpack.c.b16 %v323, %v321
    %v382 = vpack.c.b16 %v326, %v324
    %v383 = vpack.c.b16 %v327, %v325
    %v384 = vpack.c.b16 %v330, %v328
    %v385 = vpack.c.b16 %v331, %v329
    %v386 = vpack.c.b16 %v334, %v332
    %v387 = vpack.c.b16 %v335, %v333
    %v388 = vpack.c.b16 %v338, %v336
    %v389 = vpack.c.b16 %v339, %v337
    %v390 = vpack.c.b16 %v342, %v340
    %v391 = vpack.c.b16 %v343, %v341
    %v392 = vpack.c.b16 %v346, %v344
    %v393 = vpack.c.b16 %v347, %v345
    %v394 = vpack.c.b16 %v350, %v348
    %v395 = vpack.c.b16 %v351, %v349
    %v396 = vpack.c.b16 %v354, %v352
    %v397 = vpack.c.b16 %v355, %v353
    %v398 = vpack.c.b16 %v358, %v356
    %v399 = vpack.c.b16 %v359, %v357
    %v400 = vpack.c.b16 %v362, %v360
    %v401 = vpack.c.b16 %v363, %v361
    %v402 = vpack.c.b16 %v366, %v364
    %v403 = vpack.c.b16 %v367, %v365
    %v404 = vpack.c.b16 %v370, %v368
    %v405 = vpack.c.b16 %v371, %v369
    %v406 = vpack.c.b16 %v374, %v372
    %v407 = vpack.c.b16 %v375, %v373
    %440 = vmatprep.subr.bf16.mxu0 %v377
    %441 = vmatpush1.bf16.msra.mxu0 %v376
    %442 = vmatprep.subr.bf16.mxu0 %v379
    %443 = vmatpush1.bf16.msra.mxu0 %v378
    %444 = vmatprep.subr.bf16.mxu0 %v381
    %445 = vmatpush1.bf16.msra.mxu0 %v380
    %446 = vmatprep.subr.bf16.mxu0 %v383
    %447 = vmatpush1.bf16.msra.mxu0 %v382
    %448 = vmatprep.subr.bf16.mxu0 %v385
    %449 = vmatpush1.bf16.msra.mxu0 %v384
    %450 = vmatprep.subr.bf16.mxu0 %v387
    %451 = vmatpush1.bf16.msra.mxu0 %v386
    %452 = vmatprep.subr.bf16.mxu0 %v389
    %453 = vmatpush1.bf16.msra.mxu0 %v388
    %454 = vmatprep.subr.bf16.mxu0 %v391
    %455 = vmatpush1.bf16.msra.mxu0 %v390
    %456 = vmatprep.subr.bf16.mxu0 %v393
    %457 = vmatpush1.bf16.msra.mxu0 %v392
    %458 = vmatprep.subr.bf16.mxu0 %v395
    %459 = vmatpush1.bf16.msra.mxu0 %v394
    %460 = vmatprep.subr.bf16.mxu0 %v397
    %461 = vmatpush1.bf16.msra.mxu0 %v396
    %462 = vmatprep.subr.bf16.mxu0 %v399
    %463 = vmatpush1.bf16.msra.mxu0 %v398
    %464 = vmatprep.subr.bf16.mxu0 %v401
    %465 = vmatpush1.bf16.msra.mxu0 %v400
    %466 = vmatprep.subr.bf16.mxu0 %v403
    %467 = vmatpush1.bf16.msra.mxu0 %v402
    %468 = vmatprep.subr.bf16.mxu0 %v405
    %469 = vmatpush1.bf16.msra.mxu0 %v404
    %470 = vmatprep.subr.bf16.mxu0 %v407
    %471 = vmatpush1.bf16.msra.mxu0 %v406
    %472 = vmatprep.mubr.bf16.mxu0 %v235
    %473 = vmatmul.mubr.bf16.gmra.mrb[0].mxu0 %v234
    %v474 = vpop.f32.mrb[0].mxu0
    %v475 = vadd.f32 %v273, %v474
    %v476 = vpop.f32.mrb[0].mxu0
    %v477 = vadd.f32 %v277, %v476
    %v478 = vpop.f32.mrb[0].mxu0
    %v479 = vpop.f32.mrb[0].mxu0
    %480 = vdwg.mxu0
    %v481 = vmax.f32 %v475, 0.0
    %v482 = vmax.f32 %v477, 0.0
    %v483 = vpack.c.bf16 %v481, %v481
    %v484 = vpack.c.bf16 %v482, %v482
    %v485 = vld [vmem:[#allocation8] sm:$0xf]
    %v486 = vld [vmem:[#allocation8 + $0x4] sm:$0xf]
    %v487 = vld [vmem:[#allocation8 + $0x8] sm:$0xf]
    %v488 = vld [vmem:[#allocation8 + $0xc] sm:$0xf]
    %v489 = vld [vmem:[#allocation8 + $0x10] sm:$0xf]
    %v490 = vld [vmem:[#allocation8 + $0x14] sm:$0xf]
    %v491 = vld [vmem:[#allocation8 + $0x18] sm:$0xf]
    %v492 = vld [vmem:[#allocation8 + $0x1c] sm:$0xf]
    %v493 = vld [vmem:[#allocation8 + $0x20] sm:$0xf]
    %v494 = vld [vmem:[#allocation8 + $0x24] sm:$0xf]
    %v495 = vld [vmem:[#allocation8 + $0x28] sm:$0xf]
    %v496 = vld [vmem:[#allocation8 + $0x2c] sm:$0xf]
    %v497 = vld [vmem:[#allocation8 + $0x30] sm:$0xf]
    %v498 = vld [vmem:[#allocation8 + $0x34] sm:$0xf]
    %v499 = vld [vmem:[#allocation8 + $0x38] sm:$0xf]
    %v500 = vld [vmem:[#allocation8 + $0x3c] sm:$0xf]
    %v501 = vld [vmem:[#allocation8 + $0x40] sm:$0xf]
    %v502 = vld [vmem:[#allocation8 + $0x44] sm:$0xf]
    %v503 = vld [vmem:[#allocation8 + $0x48] sm:$0xf]
    %v504 = vld [vmem:[#allocation8 + $0x4c] sm:$0xf]
    %v505 = vld [vmem:[#allocation8 + $0x50] sm:$0xf]
    %v506 = vld [vmem:[#allocation8 + $0x54] sm:$0xf]
    %v507 = vld [vmem:[#allocation8 + $0x58] sm:$0xf]
    %v508 = vld [vmem:[#allocation8 + $0x5c] sm:$0xf]
    %v509 = vld [vmem:[#allocation8 + $0x60] sm:$0xf]
    %v510 = vld [vmem:[#allocation8 + $0x64] sm:$0xf]
    %v511 = vld [vmem:[#allocation8 + $0x68] sm:$0xf]
    %v512 = vld [vmem:[#allocation8 + $0x6c] sm:$0xf]
    %v513 = vld [vmem:[#allocation8 + $0x70] sm:$0xf]
    %v514 = vld [vmem:[#allocation8 + $0x74] sm:$0xf]
    %v515 = vld [vmem:[#allocation8 + $0x78] sm:$0xf]
    %v516 = vld [vmem:[#allocation8 + $0x7c] sm:$0xf]
    %v517 = vld [vmem:[%s6] sm:$0x1]
    %v519 = vlaneseq
    %v520 = vshrl.u32 %v519, 7
    %v521 = vsub.s32 0, %v520
    %v522 = vrot.slane %v517, %v521
    %v556 = vunpack.c.l.b16 %v485
    %v557 = vunpack.c.l.b16 %v486
    %v558 = vunpack.c.l.b16 %v487
    %v559 = vunpack.c.l.b16 %v488
    %v560 = vunpack.c.l.b16 %v489
    %v561 = vunpack.c.l.b16 %v490
    %v562 = vunpack.c.l.b16 %v491
    %v563 = vunpack.c.l.b16 %v492
    %v564 = vunpack.c.l.b16 %v493
    %v565 = vunpack.c.l.b16 %v494
    %v566 = vunpack.c.l.b16 %v495
    %v567 = vunpack.c.l.b16 %v496
    %v568 = vunpack.c.l.b16 %v497
    %v569 = vunpack.c.l.b16 %v498
    %v570 = vunpack.c.l.b16 %v499
    %v571 = vunpack.c.l.b16 %v500
    %v572 = vunpack.c.l.b16 %v501
    %v573 = vunpack.c.l.b16 %v502
    %v574 = vunpack.c.l.b16 %v503
    %v575 = vunpack.c.l.b16 %v504
    %v576 = vunpack.c.l.b16 %v505
    %v577 = vunpack.c.l.b16 %v506
    %v578 = vunpack.c.l.b16 %v507
    %v579 = vunpack.c.l.b16 %v508
    %v580 = vunpack.c.l.b16 %v509
    %v581 = vunpack.c.l.b16 %v510
    %v582 = vunpack.c.l.b16 %v511
    %v583 = vunpack.c.l.b16 %v512
    %v584 = vunpack.c.l.b16 %v513
    %v585 = vunpack.c.l.b16 %v514
    %v586 = vunpack.c.l.b16 %v515
    %v587 = vunpack.c.l.b16 %v516
    %v588 = vpack.c.b16 %v557, %v556
    %v589 = vpack.c.b16 %v559, %v558
    %v590 = vpack.c.b16 %v561, %v560
    %v591 = vpack.c.b16 %v563, %v562
    %v592 = vpack.c.b16 %v565, %v564
    %v593 = vpack.c.b16 %v567, %v566
    %v594 = vpack.c.b16 %v569, %v568
    %v595 = vpack.c.b16 %v571, %v570
    %v596 = vpack.c.b16 %v573, %v572
    %v597 = vpack.c.b16 %v575, %v574
    %v598 = vpack.c.b16 %v577, %v576
    %v599 = vpack.c.b16 %v579, %v578
    %v600 = vpack.c.b16 %v581, %v580
    %v601 = vpack.c.b16 %v583, %v582
    %v602 = vpack.c.b16 %v585, %v584
    %v603 = vpack.c.b16 %v587, %v586
    %620 = vmatprep.subr.bf16.mxu0 0
    %621 = vmatpush1.bf16.msra.mxu0 %v588
    %622 = vmatprep.subr.bf16.mxu0 0
    %623 = vmatpush1.bf16.msra.mxu0 %v589
    %624 = vmatprep.subr.bf16.mxu0 0
    %625 = vmatpush1.bf16.msra.mxu0 %v590
    %626 = vmatprep.subr.bf16.mxu0 0
    %627 = vmatpush1.bf16.msra.mxu0 %v591
    %628 = vmatprep.subr.bf16.mxu0 0
    %629 = vmatpush1.bf16.msra.mxu0 %v592
    %630 = vmatprep.subr.bf16.mxu0 0
    %631 = vmatpush1.bf16.msra.mxu0 %v593
    %632 = vmatprep.subr.bf16.mxu0 0
    %633 = vmatpush1.bf16.msra.mxu0 %v594
    %634 = vmatprep.subr.bf16.mxu0 0
    %635 = vmatpush1.bf16.msra.mxu0 %v595
    %636 = vmatprep.subr.bf16.mxu0 0
    %637 = vmatpush1.bf16.msra.mxu0 %v596
    %638 = vmatprep.subr.bf16.mxu0 0
    %639 = vmatpush1.bf16.msra.mxu0 %v597
    %640 = vmatprep.subr.bf16.mxu0 0
    %641 = vmatpush1.bf16.msra.mxu0 %v598
    %642 = vmatprep.subr.bf16.mxu0 0
    %643 = vmatpush1.bf16.msra.mxu0 %v599
    %644 = vmatprep.subr.bf16.mxu0 0
    %645 = vmatpush1.bf16.msra.mxu0 %v600
    %646 = vmatprep.subr.bf16.mxu0 0
    %647 = vmatpush1.bf16.msra.mxu0 %v601
    %648 = vmatprep.subr.bf16.mxu0 0
    %649 = vmatpush1.bf16.msra.mxu0 %v602
    %650 = vmatprep.subr.bf16.mxu0 0
    %651 = vmatpush1.bf16.msra.mxu0 %v603
    %652 = vmatprep.mubr.bf16.mxu0 %v484
    %653 = vmatmul.mubr.bf16.gmra.mrb[0].mxu0 %v483
    %v654 = vpop.f32.mrb[0].mxu0
    %v655 = vadd.f32 %v522, %v654
    %v656 = vpop.f32.mrb[0].mxu0
    %v657 = vpop.f32.mrb[0].mxu0
    %v658 = vpop.f32.mrb[0].mxu0
    %659 = vdwg.mxu0
    %660 = vst [vmem:[#allocation10] sm:$0xff] %v655
    // Predicated region
    $region46: #{_qnet_pallas.1} parent=1 // pred_check
      _
    $region47: #{_qnet_pallas.1} parent=1 // pred_check_branch
      %662 = sbr.rel (0) target = $region49
    $region48: #{_qnet_pallas.1} parent=1 // pred_region
      %s664 = ssub.s32 128, 128
      %665 = vsyncadd [#allocation4], %s664
      %s667 = sshll.u32 [#allocation10], 4
      %s668 = int_to_ptr.vmem [resolvable:$true] %s667
      %670 = dma.vmem_to_hbm [thread:$0]  %s668, 128, %s7, [#allocation4]
    $region49: #{_qnet_pallas.1} parent=1 // pred_fallthru
      _
    // Predicated region
    $region50: #{_qnet_pallas.1} parent=1 // pred_check
      _
    $region51: #{_qnet_pallas.1} parent=1 // pred_check_branch
      %672 = sbr.rel (0) target = $region53
    $region52: #{_qnet_pallas.1} parent=1 // pred_region
      %673 = dma.done [#allocation4], 128
    $region53: #{_qnet_pallas.1} parent=1 // pred_fallthru
      _
    %674 = vsyncpa [#allocation3], 1
    %675 = vsyncpa [#allocation6], 1
    %676 = vsyncpa [#allocation9], 1
    %677 = vsyncpa [#allocation4], 1

</llo_original>
